<compile_context>
chip_gen: v5e
topology: v5e:2x2
jax: 0.10.0
libtpu: 0.0.40
codegen_flags: <defaults>
</compile_context>

<pallas_src>
import functools

import jax
import jax.numpy as jnp
from jax import lax
from jax.experimental import pallas as pl
from jax.experimental.pallas import tpu as pltpu

MATMUL_DTYPE = jnp.bfloat16            # MXU-native operands; f32 accumulation.
INTERMEDIATE_DTYPE = jnp.bfloat16      # qkv / attn HBM round-trips.
VMEM_LIMIT_BYTES = 64 * 1024 * 1024
NEG_INF = -1e30                        # finite mask value -> no softmax NaNs.


# ----------------------------- kernel helpers -----------------------------

def _layer_norm(h, g, b, eps):
    mu = jnp.mean(h, axis=-1, keepdims=True)
    var = jnp.mean((h - mu) ** 2, axis=-1, keepdims=True)
    return (h - mu) * lax.rsqrt(var + eps) * g + b


def _matmul(h, w_ref, b_ref):
    # bf16 operands on the MXU, f32 accumulation, f32 bias add.
    y = jnp.dot(h.astype(w_ref.dtype), w_ref[...],
                preferred_element_type=jnp.float32)
    return y + b_ref[...]


# ------------------------------- kernels -----------------------------------

def qkv_kernel(x_ref, g_ref, b_ref, w_ref, wb_ref, qkv_ref, *, eps):
    """pre_norm + fused (LoRA-folded) qkv projection for one (Tq, E) tile."""
    x = x_ref[0]                                           # (Tq, E) f32
    h = _layer_norm(x, g_ref[...], b_ref[...], eps)
    qkv_ref[0] = _matmul(h, w_ref, wb_ref).astype(qkv_ref.dtype)   # (Tq, 3E)


def flash_attn_kernel(q_ref, k_ref, v_ref, o_ref, m_ref, l_ref, acc_ref,
                      *, tq, tk):
    """Causal attention with head_dim = 1, online softmax over key tiles."""
    qi = pl.program_id(1)
    ki = pl.program_id(2)
    last_ki = ((qi + 1) * tq - 1) // tk      # last key tile with unmasked cols

    @pl.when(ki == 0)
    def _():
        m_ref[...] = jnp.full_like(m_ref, NEG_INF)
        l_ref[...] = jnp.zeros_like(l_ref)
        acc_ref[...] = jnp.zeros_like(acc_ref)

    @pl.when(ki <= last_ki)                  # skip fully-masked key tiles
    def _():
        q = q_ref[0].astype(jnp.float32)     # (Tq, E)
        k = k_ref[0].astype(jnp.float32)     # (Tk, E)
        v = v_ref[0].astype(jnp.float32)     # (Tk, E)
        # head_dim == 1: per-channel outer product; scale = 1/sqrt(1) dropped.
        s = q[:, None, :] * k[None, :, :]    # (Tq, Tk, E) f32

        # Only diagonal-crossing tiles pay for the mask; interior (fully
        # causal) tiles skip the iota/compare/select entirely.
        crosses_diag = (ki + 1) * tk - 1 > qi * tq

        def _mask(t):
            row = qi * tq + lax.broadcasted_iota(jnp.int32, (tq, tk), 0)
            col = ki * tk + lax.broadcasted_iota(jnp.int32, (tq, tk), 1)
            return jnp.where((col <= row)[:, :, None], t, NEG_INF)

        s = lax.cond(crosses_diag, _mask, lambda t: t, s)

        m_prev = m_ref[...]                                  # (Tq, E)
        m_new = jnp.maximum(m_prev, jnp.max(s, axis=1))      # (Tq, E)
        alpha = jnp.exp(m_prev - m_new)
        p = jnp.exp(s - m_new[:, None, :])                   # (Tq, Tk, E)
        l_ref[...] = alpha * l_ref[...] + jnp.sum(p, axis=1)
        acc_ref[...] = alpha * acc_ref[...] + jnp.sum(p * v[None, :, :], axis=1)
        m_ref[...] = m_new

    @pl.when(ki == last_ki)
    def _():
        o_ref[0] = (acc_ref[...] *
                    pl.reciprocal(l_ref[...], approx=True)).astype(o_ref.dtype)


def proj_ffn_kernel(x_ref, a_ref, pw_ref, pb_ref, g2_ref, b2_ref,
                    fcw_ref, fcb_ref, fpw_ref, fpb_ref, o_ref, *, eps):
    """attn output projection + residual + post_norm + FFN + residual."""
    x = x_ref[0]                                           # (Tq, E) f32 residual
    attn = _matmul(a_ref[0], pw_ref, pb_ref)               # (Tq, E) f32
    h = attn + x                                           # residual 1
    res = h
    hn = _layer_norm(h, g2_ref[...], b2_ref[...], eps)
    f = _matmul(hn, fcw_ref, fcb_ref)                      # (Tq, 4E)
    f = jax.nn.gelu(f, approximate=True)                   # tanh GELU -> EUP
    f = _matmul(f, fpw_ref, fpb_ref)                       # (Tq, E)
    o_ref[0] = (f + res).astype(o_ref.dtype)               # residual 2


# ------------------------------ host wrapper ------------------------------

def _const_spec(a):
    # Constant (grid-invariant) operand: block index never changes, so the DMA
    # is issued once.  TODO(synk): at real GPT-2 widths add
    # pipeline_mode=pl.Buffered(1) here to drop the redundant second VMEM buffer.
    nd = a.ndim
    return pl.BlockSpec(a.shape, lambda *_, nd=nd: (0,) * nd)


def gpt2_block(x, params, *, eps, scaling, tq=128, tk=128):
    B, S, E = x.shape
    assert S % tq == 0 and S % tk == 0, "S must be a multiple of the tile sizes"
    # TODO(synk): pad E (and S) to multiples of 128 / tile size for arbitrary
    # shapes; the demo shapes are chosen lane-dense.
    assert E % 128 == 0, "n_embed must be a multiple of 128 (lane-dense)"
    f32 = jnp.float32

    def fold(prefix):
        # Fold LoRA into the base weight once: W' = W + scaling * A @ B.
        w = params[f"{prefix}_w"].astype(f32)
        la = params[f"{prefix}_la"].astype(f32)
        lb = params[f"{prefix}_lb"].astype(f32)
        return (w + scaling * (la @ lb)).astype(MATMUL_DTYPE)

    att_w, ap_w, fc_w, fp_w = fold("att"), fold("ap"), fold("fc"), fold("fp")
    att_b = params["att_b"].astype(f32)
    ap_b = params["ap_b"].astype(f32)
    fc_b = params["fc_b"].astype(f32)
    fp_b = params["fp_b"].astype(f32)
    ln1_g, ln1_b = params["ln1_g"].astype(f32), params["ln1_b"].astype(f32)
    ln2_g, ln2_b = params["ln2_g"].astype(f32), params["ln2_b"].astype(f32)

    cp2 = pltpu.CompilerParams(dimension_semantics=("parallel", "parallel"),
                               vmem_limit_bytes=VMEM_LIMIT_BYTES)
    cp3 = pltpu.CompilerParams(
        dimension_semantics=("parallel", "parallel", "arbitrary"),
        vmem_limit_bytes=VMEM_LIMIT_BYTES)

    # ---- kernel 1: pre_norm + fused qkv projection -------------------------
    qkv = pl.pallas_call(
        functools.partial(qkv_kernel, eps=eps),
        out_shape=jax.ShapeDtypeStruct((B, S, 3 * E), INTERMEDIATE_DTYPE),
        grid=(B, S // tq),
        in_specs=[pl.BlockSpec((1, tq, E), lambda b, i: (b, i, 0)),
                  _const_spec(ln1_g), _const_spec(ln1_b),
                  _const_spec(att_w), _const_spec(att_b)],
        out_specs=pl.BlockSpec((1, tq, 3 * E), lambda b, i: (b, i, 0)),
        compiler_params=cp2,
    )(x, ln1_g, ln1_b, att_w, att_b)

    # ---- kernel 2: causal flash attention (head_dim = 1) -------------------
    # q/k/v are picked out of the fused qkv array via BlockSpec index maps
    # (last-axis block indices 0/1/2).  K/V indices are clamped to the last
    # unmasked key tile so fully-masked causal tiles repeat the previous block
    # index and Pallas skips their DMA entirely.
    def k_idx(b, qi, ki, tq=tq, tk=tk):
        return (b, jnp.minimum(ki, ((qi + 1) * tq - 1) // tk), 1)

    def v_idx(b, qi, ki, tq=tq, tk=tk):
        return (b, jnp.minimum(ki, ((qi + 1) * tq - 1) // tk), 2)

    attn = pl.pallas_call(
        functools.partial(flash_attn_kernel, tq=tq, tk=tk),
        out_shape=jax.ShapeDtypeStruct((B, S, E), INTERMEDIATE_DTYPE),
        grid=(B, S // tq, S // tk),
        in_specs=[pl.BlockSpec((1, tq, E), lambda b, qi, ki: (b, qi, 0)),   # q
                  pl.BlockSpec((1, tk, E), k_idx),                          # k
                  pl.BlockSpec((1, tk, E), v_idx)],                         # v
        out_specs=pl.BlockSpec((1, tq, E), lambda b, qi, ki: (b, qi, 0)),
        scratch_shapes=[pltpu.VMEM((tq, E), f32),    # running max
                        pltpu.VMEM((tq, E), f32),    # running sum
                        pltpu.VMEM((tq, E), f32)],   # running weighted value
        compiler_params=cp3,
    )(qkv, qkv, qkv)

    # ---- kernel 3: attn projection + residual + post_norm + FFN + residual -
    out = pl.pallas_call(
        functools.partial(proj_ffn_kernel, eps=eps),
        out_shape=jax.ShapeDtypeStruct((B, S, E), f32),
        grid=(B, S // tq),
        in_specs=[pl.BlockSpec((1, tq, E), lambda b, i: (b, i, 0)),   # x residual
                  pl.BlockSpec((1, tq, E), lambda b, i: (b, i, 0)),   # attention
                  _const_spec(ap_w), _const_spec(ap_b),
                  _const_spec(ln2_g), _const_spec(ln2_b),
                  _const_spec(fc_w), _const_spec(fc_b),
                  _const_spec(fp_w), _const_spec(fp_b)],
        out_specs=pl.BlockSpec((1, tq, E), lambda b, i: (b, i, 0)),
        compiler_params=cp2,
    )(x, attn, ap_w, ap_b, ln2_g, ln2_b, fc_w, fc_b, fp_w, fp_b)
    return out


# ----------------------- deterministic parameter init ---------------------

def init_params(key, n_embed, r):
    E = n_embed
    dim = 4 * E

    def lora_lin(k, fin, fout):
        k1, k2, k3, k4 = jax.random.split(k, 4)
        w = 0.02 * jax.random.normal(k1, (fout, fin), jnp.float32)   # torch (out,in)
        b = 0.01 * jax.random.normal(k2, (fout,), jnp.float32)
        la = 0.05 * jax.random.normal(k3, (fin, r), jnp.float32)
        lb = 0.05 * jax.random.normal(k4, (r, fout), jnp.float32)
        return w, b, la, lb

    k_att, k_ap, k_fc, k_fp = jax.random.split(key, 4)
    att = lora_lin(k_att, E, 3 * E)     # c_att
    ap = lora_lin(k_ap, E, E)           # attn c_proj
    fc = lora_lin(k_fc, E, dim)         # ffn c_fc
    fp = lora_lin(k_fp, dim, E)         # ffn c_proj

    def pack(prefix, t):
        w, b, la, lb = t
        return {
            f"{prefix}_w": w.T,                    # pre-transpose -> (in, out)
            f"{prefix}_b": b.reshape(1, -1),
            f"{prefix}_la": la,
            f"{prefix}_lb": lb,
        }

    params = {
        "ln1_g": jnp.ones((1, E), jnp.float32),
        "ln1_b": jnp.zeros((1, E), jnp.float32),
        "ln2_g": jnp.ones((1, E), jnp.float32),
        "ln2_b": jnp.zeros((1, E), jnp.float32),
    }
    params.update(pack("att", att))
    params.update(pack("ap", ap))
    params.update(pack("fc", fc))
    params.update(pack("fp", fp))
    return params


# -------------------------- plain-JAX reference ---------------------------

def reference_block(x, p, *, eps, scaling):
    hp = jax.lax.Precision.HIGHEST

    def ln(h, g, b):
        mu = h.mean(-1, keepdims=True)
        var = ((h - mu) ** 2).mean(-1, keepdims=True)
        return (h - mu) / jnp.sqrt(var + eps) * g + b

    def lin(h, w, b, la, lb):
        return (jnp.matmul(h, w, precision=hp) + b
                + scaling * jnp.matmul(jnp.matmul(h, la, precision=hp), lb,
                                       precision=hp))

    B, S, E = x.shape
    h = ln(x, p["ln1_g"], p["ln1_b"])
    qkv = lin(h, p["att_w"], p["att_b"], p["att_la"], p["att_lb"])
    q, k, v = qkv[..., :E], qkv[..., E:2 * E], qkv[..., 2 * E:]
    scores = jnp.einsum("bih,bjh->bijh", q, k, precision=hp)  # head_dim=1, scale=1
    mask = (jnp.arange(S)[:, None] >= jnp.arange(S)[None, :])[None, :, :, None]
    scores = jnp.where(mask, scores, -jnp.inf)
    pattn = jax.nn.softmax(scores, axis=2)
    attn = jnp.einsum("bijh,bjh->bih", pattn, v, precision=hp)
    attn = lin(attn, p["ap_w"], p["ap_b"], p["ap_la"], p["ap_lb"])
    h = attn + x
    res = h
    h = ln(h, p["ln2_g"], p["ln2_b"])
    f = lin(h, p["fc_w"], p["fc_b"], p["fc_la"], p["fc_lb"])
    f = jax.nn.gelu(f, approximate=False)          # exact erf, matches PyTorch
    f = lin(f, p["fp_w"], p["fp_b"], p["fp_la"], p["fp_lb"])
    return f + res


# ---------------------------------- main -----------------------------------

if __name__ == "__main__":
    B, S, E, R = 2, 256, 128, 4      # lane-dense E; two 128-wide seq tiles
    EPS = 1e-5
    SCALING = 1.0                    # labml LoRA default: alpha = r -> alpha/r = 1

    key = jax.random.PRNGKey(0)
    kx, kp = jax.random.split(key)
    x = jax.random.normal(kx, (B, S, E), jnp.float32)
    params = init_params(kp, E, R)

    out = gpt2_block(x, params, eps=EPS, scaling=SCALING, tq=128, tk=128)
    out = jax.block_until_ready(out)

    ref = reference_block(x, params, eps=EPS, scaling=SCALING)
    ref = jax.block_until_ready(ref)

    assert out.shape == (B, S, E)
    max_diff = float(jnp.max(jnp.abs(out - ref)))
    # Tolerance accounts for bf16 matmul operands / bf16 inter-kernel
    # intermediates / tanh GELU in the kernel vs the exact f32 reference.
    assert jnp.allclose(out, ref, atol=2e-2, rtol=2e-2), (
        f"mismatch vs reference, max abs diff = {max_diff}")

    print("KERNEL_OK")
</pallas_src>

<mosaic_0001>
module attributes {stable_mosaic.version = 11 : i64} {
  func.func @qkv_kernel(%arg0: i32, %arg1: i32, %arg2: memref<1x128x128xf32, #tpu.memory_space<vmem>>, %arg3: memref<1x128xf32, #tpu.memory_space<vmem>>, %arg4: memref<1x128xf32, #tpu.memory_space<vmem>>, %arg5: memref<128x384xbf16, #tpu.memory_space<vmem>>, %arg6: memref<1x384xf32, #tpu.memory_space<vmem>>, %arg7: memref<1x128x384xbf16, #tpu.memory_space<vmem>>) attributes {dimension_semantics = [#tpu.dimension_semantics<parallel>, #tpu.dimension_semantics<parallel>], iteration_bounds = array<i64: 2, 2>, scalar_prefetch = 0 : i64, scratch_operands = 0 : i64, tpu.core_type = #tpu.core_type<tc>, window_params = [{transform_indices = @transform_0, window_bounds = array<i64: 1, 128, 128>}, {pipeline_mode = #tpu.pipeline_mode<synchronous>, transform_indices = @transform_1, window_bounds = array<i64: 1, 128>}, {pipeline_mode = #tpu.pipeline_mode<synchronous>, transform_indices = @transform_2, window_bounds = array<i64: 1, 128>}, {pipeline_mode = #tpu.pipeline_mode<synchronous>, transform_indices = @transform_3, window_bounds = array<i64: 128, 384>}, {pipeline_mode = #tpu.pipeline_mode<synchronous>, transform_indices = @transform_4, window_bounds = array<i64: 1, 384>}, {transform_indices = @transform_5, window_bounds = array<i64: 1, 128, 384>}]} {
    %c0 = arith.constant 0 : index
    %c0_0 = arith.constant 0 : index
    %c0_1 = arith.constant 0 : index
    %0 = vector.load %arg2[%c0, %c0_0, %c0_1] : memref<1x128x128xf32, #tpu.memory_space<vmem>>, vector<1x128x128xf32>
    %1 = vector.shape_cast %0 : vector<1x128x128xf32> to vector<128x128xf32>
    %c0_2 = arith.constant 0 : index
    %c0_3 = arith.constant 0 : index
    %2 = vector.load %arg3[%c0_2, %c0_3] : memref<1x128xf32, #tpu.memory_space<vmem>>, vector<1x128xf32>
    %c0_4 = arith.constant 0 : index
    %c0_5 = arith.constant 0 : index
    %3 = vector.load %arg4[%c0_4, %c0_5] : memref<1x128xf32, #tpu.memory_space<vmem>>, vector<1x128xf32>
    %cst = arith.constant dense<0.000000e+00> : vector<128xf32>
    %4 = vector.multi_reduction <add>, %1, %cst [1] : vector<128x128xf32> to vector<128xf32>
    %5 = vector.shape_cast %4 : vector<128xf32> to vector<128x1xf32>
    %cst_6 = arith.constant 1.280000e+02 : f32
    %6 = vector.broadcast %cst_6 : f32 to vector<128x1xf32>
    %7 = arith.divf %5, %6 : vector<128x1xf32>
    %8 = vector.broadcast %7 : vector<128x1xf32> to vector<128x128xf32>
    %9 = arith.subf %1, %8 : vector<128x128xf32>
    %10 = arith.mulf %9, %9 : vector<128x128xf32>
    %cst_7 = arith.constant dense<0.000000e+00> : vector<128xf32>
    %11 = vector.multi_reduction <add>, %10, %cst_7 [1] : vector<128x128xf32> to vector<128xf32>
    %12 = vector.shape_cast %11 : vector<128xf32> to vector<128x1xf32>
    %cst_8 = arith.constant 1.280000e+02 : f32
    %13 = vector.broadcast %cst_8 : f32 to vector<128x1xf32>
    %14 = arith.divf %12, %13 : vector<128x1xf32>
    %15 = vector.broadcast %7 : vector<128x1xf32> to vector<128x128xf32>
    %16 = arith.subf %1, %15 : vector<128x128xf32>
    %cst_9 = arith.constant 9.99999974E-6 : f32
    %17 = vector.broadcast %cst_9 : f32 to vector<128x1xf32>
    %18 = arith.addf %14, %17 : vector<128x1xf32>
    %19 = math.rsqrt %18 : vector<128x1xf32>
    %20 = vector.broadcast %19 : vector<128x1xf32> to vector<128x128xf32>
    %21 = arith.mulf %16, %20 : vector<128x128xf32>
    %22 = vector.broadcast %2 : vector<1x128xf32> to vector<128x128xf32>
    %23 = arith.mulf %21, %22 : vector<128x128xf32>
    %24 = vector.broadcast %3 : vector<1x128xf32> to vector<128x128xf32>
    %25 = arith.addf %23, %24 : vector<128x128xf32>
    %26 = arith.truncf %25 : vector<128x128xf32> to vector<128x128xbf16>
    %c0_10 = arith.constant 0 : index
    %c0_11 = arith.constant 0 : index
    %27 = vector.load %arg5[%c0_10, %c0_11] : memref<128x384xbf16, #tpu.memory_space<vmem>>, vector<128x384xbf16>
    %cst_12 = arith.constant dense<0.000000e+00> : vector<128x384xf32>
    %28 = tpu.matmul %26, %27, %cst_12 {dimension_numbers = #tpu.dot_dimension_numbers<[1], [0], [0], [1], [0, 0, 1, 1], [], []>} : vector<128x128xbf16>, vector<128x384xbf16>, vector<128x384xf32> -> vector<128x384xf32>
    %c0_13 = arith.constant 0 : index
    %c0_14 = arith.constant 0 : index
    %29 = vector.load %arg6[%c0_13, %c0_14] : memref<1x384xf32, #tpu.memory_space<vmem>>, vector<1x384xf32>
    %30 = vector.broadcast %29 : vector<1x384xf32> to vector<128x384xf32>
    %31 = arith.addf %28, %30 : vector<128x384xf32>
    %32 = arith.truncf %31 : vector<128x384xf32> to vector<128x384xbf16>
    %c0_15 = arith.constant 0 : index
    %c0_16 = arith.constant 0 : index
    %c0_17 = arith.constant 0 : index
    %33 = vector.load %arg7[%c0_15, %c0_16, %c0_17] : memref<1x128x384xbf16, #tpu.memory_space<vmem>>, vector<1x128x384xbf16>
    %34 = vector.shape_cast %33 : vector<1x128x384xbf16> to vector<128x384xbf16>
    %35 = vector.shape_cast %32 : vector<128x384xbf16> to vector<1x128x384xbf16>
    tpu.vector_store %arg7[%c0_15, %c0_16, %c0_17], %35 {strides = array<i32>} : memref<1x128x384xbf16, #tpu.memory_space<vmem>>, vector<1x128x384xbf16>,
    return
  }
  func.func @transform_0(%arg0: i32, %arg1: i32) -> (i32, i32, i32) {
    %c0_i32 = arith.constant 0 : i32
    %c0_i32_0 = arith.constant 0 : i32
    return %arg0, %arg1, %c0_i32 : i32, i32, i32
  }
  func.func @transform_1(%arg0: i32, %arg1: i32) -> (i32, i32) {
    %c0_i32 = arith.constant 0 : i32
    %c0_i32_0 = arith.constant 0 : i32
    %c0_i32_1 = arith.constant 0 : i32
    return %c0_i32, %c0_i32_0 : i32, i32
  }
  func.func @transform_2(%arg0: i32, %arg1: i32) -> (i32, i32) {
    %c0_i32 = arith.constant 0 : i32
    %c0_i32_0 = arith.constant 0 : i32
    %c0_i32_1 = arith.constant 0 : i32
    return %c0_i32, %c0_i32_0 : i32, i32
  }
  func.func @transform_3(%arg0: i32, %arg1: i32) -> (i32, i32) {
    %c0_i32 = arith.constant 0 : i32
    %c0_i32_0 = arith.constant 0 : i32
    %c0_i32_1 = arith.constant 0 : i32
    return %c0_i32, %c0_i32_0 : i32, i32
  }
  func.func @transform_4(%arg0: i32, %arg1: i32) -> (i32, i32) {
    %c0_i32 = arith.constant 0 : i32
    %c0_i32_0 = arith.constant 0 : i32
    %c0_i32_1 = arith.constant 0 : i32
    return %c0_i32, %c0_i32_0 : i32, i32
  }
  func.func @transform_5(%arg0: i32, %arg1: i32) -> (i32, i32, i32) {
    %c0_i32 = arith.constant 0 : i32
    %c0_i32_0 = arith.constant 0 : i32
    return %arg0, %arg1, %c0_i32 : i32, i32, i32
  }
}

</mosaic_0001>

<llo_original>
// kernel: tpu_custom_call.1
$region0: #{tpu_custom_call.1}
  #allocation0 [shape = 'u32[]', space=smem, size = 0x4, offset = 0x4, fixed_abs, tag = 'smem constant byte address 0x4 - core index']
  #allocation1 [shape = 'u32[72,128]{1,0:T(1,128)}', space=vmem, size = 0x9000, scoped, tag = 'internal scratch']
  %s0 = inlined_call_operand.hbm [shape: f32[2,256,128], index: 0, kind: input, shape index: {}]
  %s1 = inlined_call_operand.hbm [shape: f32[1,128], index: 1, kind: input, shape index: {}]
  %s2 = inlined_call_operand.hbm [shape: f32[1,128], index: 2, kind: input, shape index: {}]
  %s3 = inlined_call_operand.hbm [shape: bf16[128,384], index: 3, kind: input, shape index: {}]
  %s4 = inlined_call_operand.vmem [shape: f32[1,384], index: 4, kind: input, shape index: {}]
  %s5 = inlined_call_operand.hbm [shape: bf16[2,256,384], index: 5, kind: output, shape index: {}]
  %s6 = sld [smem:[#allocation0]]
  $region69: #{tpu_custom_call.1} parent=0
    _
  %s8 = ssub.s32 1, %s6
  %s9 = scalar_select 0, %s8, %s6
  $region1: #{tpu_custom_call.1} parent=0
    #allocation2 [shape = 'u8[131072]{0}', space=vmem, size = 0x20000, scoped, tag = 'input window, operand 0']
    #allocation3 [shape = 's32[2]{0}', space=sflag, size = 0x8, scoped, tag = 'scoped memory for tpu_custom_call.1']
    #allocation4 [shape = 's32[2]{0}', space=sflag, size = 0x8, scoped, tag = 'scoped memory for tpu_custom_call.1']
    #allocation5 [shape = 'u8[512]{0}', space=vmem, size = 0x400, scoped, tag = 'input window, operand 1, single buffered']
    #allocation6 [shape = 's32[1]{0}', space=sflag, size = 0x4, scoped, tag = 'scoped memory for tpu_custom_call.1']
    #allocation7 [shape = 'u8[512]{0}', space=vmem, size = 0x400, scoped, tag = 'input window, operand 2, single buffered']
    #allocation8 [shape = 'u8[98304]{0}', space=vmem, size = 0x18000, scoped, tag = 'input window, operand 3, single buffered']
    #allocation9 [shape = 's32[1]{0}', space=sflag, size = 0x4, scoped, tag = 'scoped memory for tpu_custom_call.1']
    #allocation10 [shape = 'u8[196608]{0}', space=vmem, size = 0x30000, scoped, tag = 'output window, operand 0']
    %10 = vsyncpa [#allocation3], 0
    %s11 = scalar_lea.sflag [#allocation3], 1
    %12 = vsyncpa %s11, 0
    %13 = vsyncpa [#allocation6], 0
    %14 = vsyncpa [#allocation9], 0
    %15 = vsyncpa [#allocation4], 0
    %s16 = scalar_lea.sflag [#allocation4], 1
    %17 = vsyncpa %s16, 0
    loop: start=0, step=1, limit=6
    $region2: #{tpu_custom_call.1} parent=1 // loop_pre_header
      _
    $region3: #{tpu_custom_call.1} parent=1 // loop_header
      %s19 = sphi 0, %s23
      %p20 = scmp.ge.s32.totalorder %s19, 6
      %s26 = sphi 0, %s38
      %s27 = sphi 0, %s34
      %s28 = sphi 0, %s26
      %s29 = sphi 0, %s27
      %s30 = sphi 0, %s28
      %s31 = sphi 0, %s29
      %s43 = sphi 0, %s45
      %s46 = sphi 0, %s43
      %s47 = sphi 0, %s46
      %s63 = sphi 0, %s47
      %s67 = sphi 0, %s67
      %s69 = sphi 0, %s67
      %s70 = sphi 0, %s69
      %s84 = sphi 0, %s70
      %s88 = sphi 0, %s88
      %s90 = sphi 0, %s88
      %s91 = sphi 0, %s90
      %s105 = sphi 0, %s91
      %s109 = sphi 0, %s109
      %s111 = sphi 0, %s109
      %s112 = sphi 0, %s111
      %s126 = sphi 0, %s112
      %s130 = sphi 0, %s130
      %s132 = sphi 0, %s130
      %s133 = sphi 0, %s132
      %s147 = sphi 0, %s133
      %s155 = sphi 0, %s157
      %s158 = sphi 0, %s155
      %s159 = sphi 0, %s158
      %s175 = sphi 0, %s159
    $region4: #{tpu_custom_call.1} parent=1 // loop_header_branch
      %22 = sbr.rel (%p20) target = $region8
    $region5: #{tpu_custom_call.1} parent=1 // loop_body
      %s24 = ssub.s32 %s19, 1
      %s25 = ssub.s32 %s19, 2
      %s32 = sadd.s32 1, %s27
      %p33 = scmp.ge.s32.totalorder %s32, 2
      %s34 = scalar_select %p33, 0, %s32
      %s35 = sadd.s32 1, %s26
      %s36 = scalar_select %p33, %s35, %s26
      %p37 = scmp.ge.s32.totalorder %s36, 2
      %s38 = scalar_select %p37, 0, %s36
      %s39 = ssub.s32 %s26, %s38
      %s40 = ssub.s32 %s27, %s34
      %s41 = sor.u32 %s39, %s40
      %p42 = scmp.eq.s32.totalorder %s41, 0
      %s44 = sadd.s32 %s43, 1
      %s45 = scalar_select %p42, %s43, %s44
      %p48 = pneg %p42
      %p49 = scmp.eq.s32.totalorder %s19, 3
      %p50 = por %p48, %p49
      %p51 = scmp.ne.s32.totalorder %s43, %s46
      %p52 = scmp.eq.s32.totalorder %s19, 0
      %p53 = por %p51, %p52
      %p54 = scmp.ne.s32.totalorder %s43, %s46
      %p55 = scmp.eq.s32.totalorder %s24, 3
      %p56 = por %p54, %p55
      %p57 = scmp.ne.s32.totalorder %s46, %s47
      %p58 = scmp.eq.s32.totalorder %s24, 0
      %p59 = por %p57, %p58
      %p60 = scmp.ne.s32.totalorder %s46, %s47
      %p61 = scmp.eq.s32.totalorder %s25, 3
      %p62 = por %p60, %p61
      %p64 = scmp.ne.s32.totalorder %s47, %s63
      %p65 = scmp.eq.s32.totalorder %s25, 0
      %p66 = por %p64, %p65
      %s68 = sadd.s32 %s67, 1
      %p71 = scmp.eq.s32.totalorder %s19, 3
      %p72 = scmp.ne.s32.totalorder %s67, %s69
      %p73 = scmp.eq.s32.totalorder %s19, 0
      %p74 = por %p72, %p73
      %p75 = scmp.ne.s32.totalorder %s67, %s69
      %p76 = scmp.eq.s32.totalorder %s24, 3
      %p77 = por %p75, %p76
      %p78 = scmp.ne.s32.totalorder %s69, %s70
      %p79 = scmp.eq.s32.totalorder %s24, 0
      %p80 = por %p78, %p79
      %p81 = scmp.ne.s32.totalorder %s69, %s70
      %p82 = scmp.eq.s32.totalorder %s25, 3
      %p83 = por %p81, %p82
      %p85 = scmp.ne.s32.totalorder %s70, %s84
      %p86 = scmp.eq.s32.totalorder %s25, 0
      %p87 = por %p85, %p86
      %s89 = sadd.s32 %s88, 1
      %p92 = scmp.eq.s32.totalorder %s19, 3
      %p93 = scmp.ne.s32.totalorder %s88, %s90
      %p94 = scmp.eq.s32.totalorder %s19, 0
      %p95 = por %p93, %p94
      %p96 = scmp.ne.s32.totalorder %s88, %s90
      %p97 = scmp.eq.s32.totalorder %s24, 3
      %p98 = por %p96, %p97
      %p99 = scmp.ne.s32.totalorder %s90, %s91
      %p100 = scmp.eq.s32.totalorder %s24, 0
      %p101 = por %p99, %p100
      %p102 = scmp.ne.s32.totalorder %s90, %s91
      %p103 = scmp.eq.s32.totalorder %s25, 3
      %p104 = por %p102, %p103
      %p106 = scmp.ne.s32.totalorder %s91, %s105
      %p107 = scmp.eq.s32.totalorder %s25, 0
      %p108 = por %p106, %p107
      %s110 = sadd.s32 %s109, 1
      %p113 = scmp.eq.s32.totalorder %s19, 3
      %p114 = scmp.ne.s32.totalorder %s109, %s111
      %p115 = scmp.eq.s32.totalorder %s19, 0
      %p116 = por %p114, %p115
      %p117 = scmp.ne.s32.totalorder %s109, %s111
      %p118 = scmp.eq.s32.totalorder %s24, 3
      %p119 = por %p117, %p118
      %p120 = scmp.ne.s32.totalorder %s111, %s112
      %p121 = scmp.eq.s32.totalorder %s24, 0
      %p122 = por %p120, %p121
      %p123 = scmp.ne.s32.totalorder %s111, %s112
      %p124 = scmp.eq.s32.totalorder %s25, 3
      %p125 = por %p123, %p124
      %p127 = scmp.ne.s32.totalorder %s112, %s126
      %p128 = scmp.eq.s32.totalorder %s25, 0
      %p129 = por %p127, %p128
      %s131 = sadd.s32 %s130, 1
      %p134 = scmp.eq.s32.totalorder %s19, 3
      %p135 = scmp.ne.s32.totalorder %s130, %s132
      %p136 = scmp.eq.s32.totalorder %s19, 0
      %p137 = por %p135, %p136
      %p138 = scmp.ne.s32.totalorder %s130, %s132
      %p139 = scmp.eq.s32.totalorder %s24, 3
      %p140 = por %p138, %p139
      %p141 = scmp.ne.s32.totalorder %s132, %s133
      %p142 = scmp.eq.s32.totalorder %s24, 0
      %p143 = por %p141, %p142
      %p144 = scmp.ne.s32.totalorder %s132, %s133
      %p145 = scmp.eq.s32.totalorder %s25, 3
      %p146 = por %p144, %p145
      %p148 = scmp.ne.s32.totalorder %s133, %s147
      %p149 = scmp.eq.s32.totalorder %s25, 0
      %p150 = por %p148, %p149
      %s151 = ssub.s32 %s26, %s38
      %s152 = ssub.s32 %s27, %s34
      %s153 = sor.u32 %s151, %s152
      %p154 = scmp.eq.s32.totalorder %s153, 0
      %s156 = sadd.s32 %s155, 1
      %s157 = scalar_select %p154, %s155, %s156
      %p160 = pneg %p154
      %p161 = scmp.eq.s32.totalorder %s19, 3
      %p162 = por %p160, %p161
      %p163 = scmp.ne.s32.totalorder %s155, %s158
      %p164 = scmp.eq.s32.totalorder %s19, 0
      %p165 = por %p163, %p164
      %p166 = scmp.ne.s32.totalorder %s155, %s158
      %p167 = scmp.eq.s32.totalorder %s24, 3
      %p168 = por %p166, %p167
      %p169 = scmp.ne.s32.totalorder %s158, %s159
      %p170 = scmp.eq.s32.totalorder %s24, 0
      %p171 = por %p169, %p170
      %p172 = scmp.ne.s32.totalorder %s158, %s159
      %p173 = scmp.eq.s32.totalorder %s25, 3
      %p174 = por %p172, %p173
      %p176 = scmp.ne.s32.totalorder %s159, %s175
      %p177 = scmp.eq.s32.totalorder %s25, 0
      %p178 = por %p176, %p177
      %p179 = scmp.le.s32.totalorder 1, %s19
      %p180 = scmp.lt.s32.totalorder %s19, 5
      %p181 = pnand %p179, %p180
      %p182 = pneg %p181
      // Predicated region
      $region9: #{tpu_custom_call.1} parent=5 // pred_check
        _
      $region10: #{tpu_custom_call.1} parent=5 // pred_check_branch
        %184 = sbr.rel (%p181) target = $region12
      $region11: #{tpu_custom_call.1} parent=5 // pred_region
        %s185 = ssub.s32 %s19, 1
        // Predicated region
        $region13: #{tpu_custom_call.1} parent=11 // pred_check
          %p186 = pneg %p80
        $region14: #{tpu_custom_call.1} parent=11 // pred_check_branch
          %188 = sbr.rel (%p186) target = $region16
        $region15: #{tpu_custom_call.1} parent=11 // pred_region
          %190 = vsyncadd [#allocation6], 0
          %s192 = sshll.u32 %s1, 4
          %s193 = int_to_ptr.hbm [resolvable:$true] %s192
          %s194 = sshll.u32 [#allocation5], 4
          %s195 = int_to_ptr.vmem [resolvable:$true] %s194
          %197 = dma.hbm_to_vmem [thread:$0]  %s193, 16, %s195, [#allocation6]
        $region16: #{tpu_custom_call.1} parent=11 // pred_fallthru
          _
        // Predicated region
        $region17: #{tpu_custom_call.1} parent=11 // pred_check
          %p198 = pneg %p101
        $region18: #{tpu_custom_call.1} parent=11 // pred_check_branch
          %200 = sbr.rel (%p198) target = $region20
        $region19: #{tpu_custom_call.1} parent=11 // pred_region
          %202 = vsyncadd [#allocation6], 0
          %s204 = sshll.u32 %s2, 4
          %s205 = int_to_ptr.hbm [resolvable:$true] %s204
          %s206 = sshll.u32 [#allocation7], 4
          %s207 = int_to_ptr.vmem [resolvable:$true] %s206
          %209 = dma.hbm_to_vmem [thread:$0]  %s205, 16, %s207, [#allocation6]
        $region20: #{tpu_custom_call.1} parent=11 // pred_fallthru
          _
        // Predicated region
        $region21: #{tpu_custom_call.1} parent=11 // pred_check
          %p210 = pneg %p122
        $region22: #{tpu_custom_call.1} parent=11 // pred_check_branch
          %212 = sbr.rel (%p210) target = $region24
        $region23: #{tpu_custom_call.1} parent=11 // pred_region
          %214 = vsyncadd [#allocation9], 0
          %s215 = sshll.u32 %s3, 4
          %s216 = int_to_ptr.hbm [resolvable:$true] %s215
          %s217 = sshll.u32 [#allocation8], 4
          %s218 = int_to_ptr.vmem [resolvable:$true] %s217
          %223 = dma.hbm_to_vmem [thread:$0]  %s216, 3072, %s218, [#allocation9], 192, 192, 12
        $region24: #{tpu_custom_call.1} parent=11 // pred_fallthru
          _
        // Predicated region
        $region25: #{tpu_custom_call.1} parent=11 // pred_check
          %p224 = pneg %p143
        $region26: #{tpu_custom_call.1} parent=11 // pred_check_branch
          %226 = sbr.rel (%p224) target = $region28
        $region27: #{tpu_custom_call.1} parent=11 // pred_region
          _
        $region28: #{tpu_custom_call.1} parent=11 // pred_fallthru
          _
      $region12: #{tpu_custom_call.1} parent=5 // pred_fallthru
        _
      %p227 = scmp.lt.s32.totalorder %s19, 4
      // Predicated region
      $region29: #{tpu_custom_call.1} parent=5 // pred_check
        %p228 = pneg %p227
      $region30: #{tpu_custom_call.1} parent=5 // pred_check_branch
        %230 = sbr.rel (%p228) target = $region32
      $region31: #{tpu_custom_call.1} parent=5 // pred_region
        // Predicated region
        $region33: #{tpu_custom_call.1} parent=31 // pred_check
          %p231 = pneg %p53
        $region34: #{tpu_custom_call.1} parent=31 // pred_check_branch
          %233 = sbr.rel (%p231) target = $region36
        $region35: #{tpu_custom_call.1} parent=31 // pred_region
          %s234 = sand.u32 %s43, 1
          %s235 = scalar_lea.sflag [#allocation3], %s234
          %s236 = sand.u32 %s43, 1
          %s237 = smul.addr %s236, 128
          %s238 = scalar_lea.vmem [#allocation2], %s237
          %s239 = smul.u32 16, %s27
          %241 = vsyncadd %s235, 0
          %s242 = smul.addr %s26, 32
          %s243 = sadd.s32 %s239, %s242
          %s244 = smul.addr %s243, 8
          %s245 = scalar_lea.hbm %s0, %s244
          %s246 = sshll.u32 %s245, 4
          %s247 = int_to_ptr.hbm [resolvable:$true] %s246
          %s248 = sshll.u32 %s238, 4
          %s249 = int_to_ptr.vmem [resolvable:$true] %s248
          %254 = dma.hbm_to_vmem [thread:$0]  %s247, 2048, %s249, %s235, 128, 128, 8
        $region36: #{tpu_custom_call.1} parent=31 // pred_fallthru
          _
      $region32: #{tpu_custom_call.1} parent=5 // pred_fallthru
        _
      %p255 = scmp.le.s32.totalorder 1, %s19
      %p256 = scmp.lt.s32.totalorder %s19, 5
      %p257 = pnand %p255, %p256
      %p258 = pneg %p257
      // Predicated region
      $region37: #{tpu_custom_call.1} parent=5 // pred_check
        _
      $region38: #{tpu_custom_call.1} parent=5 // pred_check_branch
        %260 = sbr.rel (%p257) target = $region40
      $region39: #{tpu_custom_call.1} parent=5 // pred_region
        %s261 = ssub.s32 %s19, 1
        %s262 = sand.u32 %s46, 1
        %s263 = scalar_lea.sflag [#allocation3], %s262
        %s264 = sand.u32 %s46, 1
        %s265 = smul.addr %s264, 128
        %s266 = scalar_lea.vmem [#allocation2], %s265
        // Predicated region
        $region41: #{tpu_custom_call.1} parent=39 // pred_check
          %p267 = pneg %p59
        $region42: #{tpu_custom_call.1} parent=39 // pred_check_branch
          %269 = sbr.rel (%p267) target = $region44
        $region43: #{tpu_custom_call.1} parent=39 // pred_region
          %271 = dma.done %s263, 2048
        $region44: #{tpu_custom_call.1} parent=39 // pred_fallthru
          _
        // Predicated region
        $region45: #{tpu_custom_call.1} parent=39 // pred_check
          %p272 = pneg %p80
        $region46: #{tpu_custom_call.1} parent=39 // pred_check_branch
          %274 = sbr.rel (%p272) target = $region48
        $region47: #{tpu_custom_call.1} parent=39 // pred_region
          %276 = dma.done [#allocation6], 16
        $region48: #{tpu_custom_call.1} parent=39 // pred_fallthru
          _
        // Predicated region
        $region49: #{tpu_custom_call.1} parent=39 // pred_check
          %p277 = pneg %p101
        $region50: #{tpu_custom_call.1} parent=39 // pred_check_branch
          %279 = sbr.rel (%p277) target = $region52
        $region51: #{tpu_custom_call.1} parent=39 // pred_region
          %281 = dma.done [#allocation6], 16
        $region52: #{tpu_custom_call.1} parent=39 // pred_fallthru
          _
        // Predicated region
        $region53: #{tpu_custom_call.1} parent=39 // pred_check
          %p282 = pneg %p122
        $region54: #{tpu_custom_call.1} parent=39 // pred_check_branch
          %284 = sbr.rel (%p282) target = $region56
        $region55: #{tpu_custom_call.1} parent=39 // pred_region
          %286 = dma.done [#allocation9], 3072
        $region56: #{tpu_custom_call.1} parent=39 // pred_fallthru
          _
        %s287 = sand.u32 %s46, 1
        %s288 = scalar_lea.sflag [#allocation3], %s287
        %s289 = sand.u32 %s46, 1
        %s290 = smul.addr %s289, 128
        %s291 = scalar_lea.vmem [#allocation2], %s290
        %p292 = pneg %p59
        %p293 = pneg %p56
        %p294 = pneg %p80
        %p295 = pneg %p77
        %p296 = pneg %p101
        %p297 = pneg %p98
        %p298 = pneg %p122
        %p299 = pneg %p119
        %p300 = pneg %p143
        %p301 = pneg %p140
        %p302 = pneg %p171
        %p303 = pneg %p168
        %s304 = sand.u32 %s158, 1
        %s305 = scalar_lea.sflag [#allocation4], %s304
        %s306 = sand.u32 %s158, 1
        %s307 = smul.addr %s306, 192
        %s308 = scalar_lea.vmem [#allocation10], %s307
        %s309 = smul.u32 16, %s29
        %s310 = smul.u32 16, %s29
        %v311 = vld [vmem:[%s266] sm:$0xff]
        %v312 = vld [vmem:[%s266 + $0x8] sm:$0xff]
        %v313 = vld [vmem:[%s266 + $0x10] sm:$0xff]
        %v314 = vld [vmem:[%s266 + $0x18] sm:$0xff]
        %v315 = vld [vmem:[%s266 + $0x20] sm:$0xff]
        %v316 = vld [vmem:[%s266 + $0x28] sm:$0xff]
        %v317 = vld [vmem:[%s266 + $0x30] sm:$0xff]
        %v318 = vld [vmem:[%s266 + $0x38] sm:$0xff]
        %v319 = vld [vmem:[%s266 + $0x40] sm:$0xff]
        %v320 = vld [vmem:[%s266 + $0x48] sm:$0xff]
        %v321 = vld [vmem:[%s266 + $0x50] sm:$0xff]
        %v322 = vld [vmem:[%s266 + $0x58] sm:$0xff]
        %v323 = vld [vmem:[%s266 + $0x60] sm:$0xff]
        %v324 = vld [vmem:[%s266 + $0x68] sm:$0xff]
        %v325 = vld [vmem:[%s266 + $0x70] sm:$0xff]
        %v326 = vld [vmem:[%s266 + $0x78] sm:$0xff]
        %v327 = vld [vmem:[#allocation5] sm:$0x1]
        %v328 = vld [vmem:[#allocation7] sm:$0x1]
        %329 = vadd.xlane.f32.xlu0 %v311
        %v330 = vpop.xlane.xlu0 %329
        %331 = vadd.xlane.f32.xlu0 %v312
        %v332 = vpop.xlane.xlu0 %331
        %333 = vadd.xlane.f32.xlu0 %v313
        %v334 = vpop.xlane.xlu0 %333
        %335 = vadd.xlane.f32.xlu0 %v314
        %v336 = vpop.xlane.xlu0 %335
        %337 = vadd.xlane.f32.xlu0 %v315
        %v338 = vpop.xlane.xlu0 %337
        %339 = vadd.xlane.f32.xlu0 %v316
        %v340 = vpop.xlane.xlu0 %339
        %341 = vadd.xlane.f32.xlu0 %v317
        %v342 = vpop.xlane.xlu0 %341
        %343 = vadd.xlane.f32.xlu0 %v318
        %v344 = vpop.xlane.xlu0 %343
        %345 = vadd.xlane.f32.xlu0 %v319
        %v346 = vpop.xlane.xlu0 %345
        %347 = vadd.xlane.f32.xlu0 %v320
        %v348 = vpop.xlane.xlu0 %347
        %349 = vadd.xlane.f32.xlu0 %v321
        %v350 = vpop.xlane.xlu0 %349
        %351 = vadd.xlane.f32.xlu0 %v322
        %v352 = vpop.xlane.xlu0 %351
        %353 = vadd.xlane.f32.xlu0 %v323
        %v354 = vpop.xlane.xlu0 %353
        %355 = vadd.xlane.f32.xlu0 %v324
        %v356 = vpop.xlane.xlu0 %355
        %357 = vadd.xlane.f32.xlu0 %v325
        %v358 = vpop.xlane.xlu0 %357
        %359 = vadd.xlane.f32.xlu0 %v326
        %v360 = vpop.xlane.xlu0 %359
        %v361 = vrcp.pop 128.0
        %v362 = vmul.f32 128.0, %v361
        %v363 = vsub.f32 1.0, %v362
        %v364 = vmul.f32 %v361, %v363
        %v365 = vadd.f32 %v361, %v364
        %vm366 = vweird.f32 %v361
        %v367 = vsel %vm366, %v361, %v365
        %v368 = vmul.f32 %v330, %v367
        %v369 = vmul.f32 %v332, %v367
        %v370 = vmul.f32 %v334, %v367
        %v371 = vmul.f32 %v336, %v367
        %v372 = vmul.f32 %v338, %v367
        %v373 = vmul.f32 %v340, %v367
        %v374 = vmul.f32 %v342, %v367
        %v375 = vmul.f32 %v344, %v367
        %v376 = vmul.f32 %v346, %v367
        %v377 = vmul.f32 %v348, %v367
        %v378 = vmul.f32 %v350, %v367
        %v379 = vmul.f32 %v352, %v367
        %v380 = vmul.f32 %v354, %v367
        %v381 = vmul.f32 %v356, %v367
        %v382 = vmul.f32 %v358, %v367
        %v383 = vmul.f32 %v360, %v367
        %v384 = vsub.f32 %v311, %v368
        %v385 = vsub.f32 %v312, %v369
        %v386 = vsub.f32 %v313, %v370
        %v387 = vsub.f32 %v314, %v371
        %v388 = vsub.f32 %v315, %v372
        %v389 = vsub.f32 %v316, %v373
        %v390 = vsub.f32 %v317, %v374
        %v391 = vsub.f32 %v318, %v375
        %v392 = vsub.f32 %v319, %v376
        %v393 = vsub.f32 %v320, %v377
        %v394 = vsub.f32 %v321, %v378
        %v395 = vsub.f32 %v322, %v379
        %v396 = vsub.f32 %v323, %v380
        %v397 = vsub.f32 %v324, %v381
        %v398 = vsub.f32 %v325, %v382
        %v399 = vsub.f32 %v326, %v383
        %v400 = vmul.f32 %v384, %v384
        %v401 = vmul.f32 %v385, %v385
        %v402 = vmul.f32 %v386, %v386
        %v403 = vmul.f32 %v387, %v387
        %v404 = vmul.f32 %v388, %v388
        %v405 = vmul.f32 %v389, %v389
        %v406 = vmul.f32 %v390, %v390
        %v407 = vmul.f32 %v391, %v391
        %v408 = vmul.f32 %v392, %v392
        %v409 = vmul.f32 %v393, %v393
        %v410 = vmul.f32 %v394, %v394
        %v411 = vmul.f32 %v395, %v395
        %v412 = vmul.f32 %v396, %v396
        %v413 = vmul.f32 %v397, %v397
        %v414 = vmul.f32 %v398, %v398
        %v415 = vmul.f32 %v399, %v399
        %416 = vadd.xlane.f32.xlu0 %v400
        %v417 = vpop.xlane.xlu0 %416
        %418 = vadd.xlane.f32.xlu0 %v401
        %v419 = vpop.xlane.xlu0 %418
        %420 = vadd.xlane.f32.xlu0 %v402
        %v421 = vpop.xlane.xlu0 %420
        %422 = vadd.xlane.f32.xlu0 %v403
        %v423 = vpop.xlane.xlu0 %422
        %424 = vadd.xlane.f32.xlu0 %v404
        %v425 = vpop.xlane.xlu0 %424
        %426 = vadd.xlane.f32.xlu0 %v405
        %v427 = vpop.xlane.xlu0 %426
        %428 = vadd.xlane.f32.xlu0 %v406
        %v429 = vpop.xlane.xlu0 %428
        %430 = vadd.xlane.f32.xlu0 %v407
        %v431 = vpop.xlane.xlu0 %430
        %432 = vadd.xlane.f32.xlu0 %v408
        %v433 = vpop.xlane.xlu0 %432
        %434 = vadd.xlane.f32.xlu0 %v409
        %v435 = vpop.xlane.xlu0 %434
        %436 = vadd.xlane.f32.xlu0 %v410
        %v437 = vpop.xlane.xlu0 %436
        %438 = vadd.xlane.f32.xlu0 %v411
        %v439 = vpop.xlane.xlu0 %438
        %440 = vadd.xlane.f32.xlu0 %v412
        %v441 = vpop.xlane.xlu0 %440
        %442 = vadd.xlane.f32.xlu0 %v413
        %v443 = vpop.xlane.xlu0 %442
        %444 = vadd.xlane.f32.xlu0 %v414
        %v445 = vpop.xlane.xlu0 %444
        %446 = vadd.xlane.f32.xlu0 %v415
        %v447 = vpop.xlane.xlu0 %446
        %v448 = vmul.f32 %v417, %v367
        %v449 = vmul.f32 %v419, %v367
        %v450 = vmul.f32 %v421, %v367
        %v451 = vmul.f32 %v423, %v367
        %v452 = vmul.f32 %v425, %v367
        %v453 = vmul.f32 %v427, %v367
        %v454 = vmul.f32 %v429, %v367
        %v455 = vmul.f32 %v431, %v367
        %v456 = vmul.f32 %v433, %v367
        %v457 = vmul.f32 %v435, %v367
        %v458 = vmul.f32 %v437, %v367
        %v459 = vmul.f32 %v439, %v367
        %v460 = vmul.f32 %v441, %v367
        %v461 = vmul.f32 %v443, %v367
        %v462 = vmul.f32 %v445, %v367
        %v463 = vmul.f32 %v447, %v367
        %v464 = vadd.f32 %v448, 1e-05
        %v465 = vadd.f32 %v449, 1e-05
        %v466 = vadd.f32 %v450, 1e-05
        %v467 = vadd.f32 %v451, 1e-05
        %v468 = vadd.f32 %v452, 1e-05
        %v469 = vadd.f32 %v453, 1e-05
        %v470 = vadd.f32 %v454, 1e-05
        %v471 = vadd.f32 %v455, 1e-05
        %v472 = vadd.f32 %v456, 1e-05
        %v473 = vadd.f32 %v457, 1e-05
        %v474 = vadd.f32 %v458, 1e-05
        %v475 = vadd.f32 %v459, 1e-05
        %v476 = vadd.f32 %v460, 1e-05
        %v477 = vadd.f32 %v461, 1e-05
        %v478 = vadd.f32 %v462, 1e-05
        %v479 = vadd.f32 %v463, 1e-05
        %v480 = vrsqrt.pop %v464
        %v481 = vmul.f32 %v480, %v464
        %v482 = vmul.f32 %v481, %v480
        %v483 = vmul.f32 0.5, %v482
        %v484 = vsub.f32 1.5, %v483
        %v485 = vmul.f32 %v480, %v484
        %vm486 = vweird.f32 %v464
        %vm487 = vweird.f32 %v480
        %vm488 = vmor %vm486, %vm487
        %v489 = vsel %vm488, %v480, %v485
        %v490 = vrsqrt.pop %v465
        %v491 = vmul.f32 %v490, %v465
        %v492 = vmul.f32 %v491, %v490
        %v493 = vmul.f32 0.5, %v492
        %v494 = vsub.f32 1.5, %v493
        %v495 = vmul.f32 %v490, %v494
        %vm496 = vweird.f32 %v465
        %vm497 = vweird.f32 %v490
        %vm498 = vmor %vm496, %vm497
        %v499 = vsel %vm498, %v490, %v495
        %v500 = vrsqrt.pop %v466
        %v501 = vmul.f32 %v500, %v466
        %v502 = vmul.f32 %v501, %v500
        %v503 = vmul.f32 0.5, %v502
        %v504 = vsub.f32 1.5, %v503
        %v505 = vmul.f32 %v500, %v504
        %vm506 = vweird.f32 %v466
        %vm507 = vweird.f32 %v500
        %vm508 = vmor %vm506, %vm507
        %v509 = vsel %vm508, %v500, %v505
        %v510 = vrsqrt.pop %v467
        %v511 = vmul.f32 %v510, %v467
        %v512 = vmul.f32 %v511, %v510
        %v513 = vmul.f32 0.5, %v512
        %v514 = vsub.f32 1.5, %v513
        %v515 = vmul.f32 %v510, %v514
        %vm516 = vweird.f32 %v467
        %vm517 = vweird.f32 %v510
        %vm518 = vmor %vm516, %vm517
        %v519 = vsel %vm518, %v510, %v515
        %v520 = vrsqrt.pop %v468
        %v521 = vmul.f32 %v520, %v468
        %v522 = vmul.f32 %v521, %v520
        %v523 = vmul.f32 0.5, %v522
        %v524 = vsub.f32 1.5, %v523
        %v525 = vmul.f32 %v520, %v524
        %vm526 = vweird.f32 %v468
        %vm527 = vweird.f32 %v520
        %vm528 = vmor %vm526, %vm527
        %v529 = vsel %vm528, %v520, %v525
        %v530 = vrsqrt.pop %v469
        %v531 = vmul.f32 %v530, %v469
        %v532 = vmul.f32 %v531, %v530
        %v533 = vmul.f32 0.5, %v532
        %v534 = vsub.f32 1.5, %v533
        %v535 = vmul.f32 %v530, %v534
        %vm536 = vweird.f32 %v469
        %vm537 = vweird.f32 %v530
        %vm538 = vmor %vm536, %vm537
        %v539 = vsel %vm538, %v530, %v535
        %v540 = vrsqrt.pop %v470
        %v541 = vmul.f32 %v540, %v470
        %v542 = vmul.f32 %v541, %v540
        %v543 = vmul.f32 0.5, %v542
        %v544 = vsub.f32 1.5, %v543
        %v545 = vmul.f32 %v540, %v544
        %vm546 = vweird.f32 %v470
        %vm547 = vweird.f32 %v540
        %vm548 = vmor %vm546, %vm547
        %v549 = vsel %vm548, %v540, %v545
        %v550 = vrsqrt.pop %v471
        %v551 = vmul.f32 %v550, %v471
        %v552 = vmul.f32 %v551, %v550
        %v553 = vmul.f32 0.5, %v552
        %v554 = vsub.f32 1.5, %v553
        %v555 = vmul.f32 %v550, %v554
        %vm556 = vweird.f32 %v471
        %vm557 = vweird.f32 %v550
        %vm558 = vmor %vm556, %vm557
        %v559 = vsel %vm558, %v550, %v555
        %v560 = vrsqrt.pop %v472
        %v561 = vmul.f32 %v560, %v472
        %v562 = vmul.f32 %v561, %v560
        %v563 = vmul.f32 0.5, %v562
        %v564 = vsub.f32 1.5, %v563
        %v565 = vmul.f32 %v560, %v564
        %vm566 = vweird.f32 %v472
        %vm567 = vweird.f32 %v560
        %vm568 = vmor %vm566, %vm567
        %v569 = vsel %vm568, %v560, %v565
        %v570 = vrsqrt.pop %v473
        %v571 = vmul.f32 %v570, %v473
        %v572 = vmul.f32 %v571, %v570
        %v573 = vmul.f32 0.5, %v572
        %v574 = vsub.f32 1.5, %v573
        %v575 = vmul.f32 %v570, %v574
        %vm576 = vweird.f32 %v473
        %vm577 = vweird.f32 %v570
        %vm578 = vmor %vm576, %vm577
        %v579 = vsel %vm578, %v570, %v575
        %v580 = vrsqrt.pop %v474
        %v581 = vmul.f32 %v580, %v474
        %v582 = vmul.f32 %v581, %v580
        %v583 = vmul.f32 0.5, %v582
        %v584 = vsub.f32 1.5, %v583
        %v585 = vmul.f32 %v580, %v584
        %vm586 = vweird.f32 %v474
        %vm587 = vweird.f32 %v580
        %vm588 = vmor %vm586, %vm587
        %v589 = vsel %vm588, %v580, %v585
        %v590 = vrsqrt.pop %v475
        %v591 = vmul.f32 %v590, %v475
        %v592 = vmul.f32 %v591, %v590
        %v593 = vmul.f32 0.5, %v592
        %v594 = vsub.f32 1.5, %v593
        %v595 = vmul.f32 %v590, %v594
        %vm596 = vweird.f32 %v475
        %vm597 = vweird.f32 %v590
        %vm598 = vmor %vm596, %vm597
        %v599 = vsel %vm598, %v590, %v595
        %v600 = vrsqrt.pop %v476
        %v601 = vmul.f32 %v600, %v476
        %v602 = vmul.f32 %v601, %v600
        %v603 = vmul.f32 0.5, %v602
        %v604 = vsub.f32 1.5, %v603
        %v605 = vmul.f32 %v600, %v604
        %vm606 = vweird.f32 %v476
        %vm607 = vweird.f32 %v600
        %vm608 = vmor %vm606, %vm607
        %v609 = vsel %vm608, %v600, %v605
        %v610 = vrsqrt.pop %v477
        %v611 = vmul.f32 %v610, %v477
        %v612 = vmul.f32 %v611, %v610
        %v613 = vmul.f32 0.5, %v612
        %v614 = vsub.f32 1.5, %v613
        %v615 = vmul.f32 %v610, %v614
        %vm616 = vweird.f32 %v477
        %vm617 = vweird.f32 %v610
        %vm618 = vmor %vm616, %vm617
        %v619 = vsel %vm618, %v610, %v615
        %v620 = vrsqrt.pop %v478
        %v621 = vmul.f32 %v620, %v478
        %v622 = vmul.f32 %v621, %v620
        %v623 = vmul.f32 0.5, %v622
        %v624 = vsub.f32 1.5, %v623
        %v625 = vmul.f32 %v620, %v624
        %vm626 = vweird.f32 %v478
        %vm627 = vweird.f32 %v620
        %vm628 = vmor %vm626, %vm627
        %v629 = vsel %vm628, %v620, %v625
        %v630 = vrsqrt.pop %v479
        %v631 = vmul.f32 %v630, %v479
        %v632 = vmul.f32 %v631, %v630
        %v633 = vmul.f32 0.5, %v632
        %v634 = vsub.f32 1.5, %v633
        %v635 = vmul.f32 %v630, %v634
        %vm636 = vweird.f32 %v479
        %vm637 = vweird.f32 %v630
        %vm638 = vmor %vm636, %vm637
        %v639 = vsel %vm638, %v630, %v635
        %v640 = vmul.f32 %v384, %v489
        %v641 = vmul.f32 %v385, %v499
        %v642 = vmul.f32 %v386, %v509
        %v643 = vmul.f32 %v387, %v519
        %v644 = vmul.f32 %v388, %v529
        %v645 = vmul.f32 %v389, %v539
        %v646 = vmul.f32 %v390, %v549
        %v647 = vmul.f32 %v391, %v559
        %v648 = vmul.f32 %v392, %v569
        %v649 = vmul.f32 %v393, %v579
        %v650 = vmul.f32 %v394, %v589
        %v651 = vmul.f32 %v395, %v599
        %v652 = vmul.f32 %v396, %v609
        %v653 = vmul.f32 %v397, %v619
        %v654 = vmul.f32 %v398, %v629
        %v655 = vmul.f32 %v399, %v639
        %v657 = vperm.slane %v327, 0
        %v659 = vmul.f32 %v640, %v657
        %v660 = vmul.f32 %v641, %v657
        %v661 = vmul.f32 %v642, %v657
        %v662 = vmul.f32 %v643, %v657
        %v663 = vmul.f32 %v644, %v657
        %v664 = vmul.f32 %v645, %v657
        %v665 = vmul.f32 %v646, %v657
        %v666 = vmul.f32 %v647, %v657
        %v667 = vmul.f32 %v648, %v657
        %v668 = vmul.f32 %v649, %v657
        %v669 = vmul.f32 %v650, %v657
        %v670 = vmul.f32 %v651, %v657
        %v671 = vmul.f32 %v652, %v657
        %v672 = vmul.f32 %v653, %v657
        %v673 = vmul.f32 %v654, %v657
        %v674 = vmul.f32 %v655, %v657
        %v676 = vperm.slane %v328, 0
        %v678 = vadd.f32 %v659, %v676
        %v679 = vadd.f32 %v660, %v676
        %v680 = vadd.f32 %v661, %v676
        %v681 = vadd.f32 %v662, %v676
        %v682 = vadd.f32 %v663, %v676
        %v683 = vadd.f32 %v664, %v676
        %v684 = vadd.f32 %v665, %v676
        %v685 = vadd.f32 %v666, %v676
        %v686 = vadd.f32 %v667, %v676
        %v687 = vadd.f32 %v668, %v676
        %v688 = vadd.f32 %v669, %v676
        %v689 = vadd.f32 %v670, %v676
        %v690 = vadd.f32 %v671, %v676
        %v691 = vadd.f32 %v672, %v676
        %v692 = vadd.f32 %v673, %v676
        %v693 = vadd.f32 %v674, %v676
        %v694 = vpack.c.bf16 %v679, %v678
        %v695 = vpack.c.bf16 %v681, %v680
        %v696 = vpack.c.bf16 %v683, %v682
        %v697 = vpack.c.bf16 %v685, %v684
        %v698 = vpack.c.bf16 %v687, %v686
        %v699 = vpack.c.bf16 %v689, %v688
        %v700 = vpack.c.bf16 %v691, %v690
        %v701 = vpack.c.bf16 %v693, %v692
        %v702 = vld [vmem:[#allocation8] sm:$0xff]
        %v703 = vld [vmem:[#allocation8 + $0x8] sm:$0xf]
        %v704 = vld [vmem:[#allocation8 + $0xc] sm:$0xff]
        %v705 = vld [vmem:[#allocation8 + $0x14] sm:$0xf]
        %v706 = vld [vmem:[#allocation8 + $0x18] sm:$0xff]
        %v707 = vld [vmem:[#allocation8 + $0x20] sm:$0xf]
        %v708 = vld [vmem:[#allocation8 + $0x24] sm:$0xff]
        %v709 = vld [vmem:[#allocation8 + $0x2c] sm:$0xf]
        %v710 = vld [vmem:[#allocation8 + $0x30] sm:$0xff]
        %v711 = vld [vmem:[#allocation8 + $0x38] sm:$0xf]
        %v712 = vld [vmem:[#allocation8 + $0x3c] sm:$0xff]
        %v713 = vld [vmem:[#allocation8 + $0x44] sm:$0xf]
        %v714 = vld [vmem:[#allocation8 + $0x48] sm:$0xff]
        %v715 = vld [vmem:[#allocation8 + $0x50] sm:$0xf]
        %v716 = vld [vmem:[#allocation8 + $0x54] sm:$0xff]
        %v717 = vld [vmem:[#allocation8 + $0x5c] sm:$0xf]
        %v718 = vld [vmem:[#allocation8 + $0x60] sm:$0xff]
        %v719 = vld [vmem:[#allocation8 + $0x68] sm:$0xf]
        %v720 = vld [vmem:[#allocation8 + $0x6c] sm:$0xff]
        %v721 = vld [vmem:[#allocation8 + $0x74] sm:$0xf]
        %v722 = vld [vmem:[#allocation8 + $0x78] sm:$0xff]
        %v723 = vld [vmem:[#allocation8 + $0x80] sm:$0xf]
        %v724 = vld [vmem:[#allocation8 + $0x84] sm:$0xff]
        %v725 = vld [vmem:[#allocation8 + $0x8c] sm:$0xf]
        %v726 = vld [vmem:[#allocation8 + $0x90] sm:$0xff]
        %v727 = vld [vmem:[#allocation8 + $0x98] sm:$0xf]
        %v728 = vld [vmem:[#allocation8 + $0x9c] sm:$0xff]
        %v729 = vld [vmem:[#allocation8 + $0xa4] sm:$0xf]
        %v730 = vld [vmem:[#allocation8 + $0xa8] sm:$0xff]
        %v731 = vld [vmem:[#allocation8 + $0xb0] sm:$0xf]
        %v732 = vld [vmem:[#allocation8 + $0xb4] sm:$0xff]
        %v733 = vld [vmem:[#allocation8 + $0xbc] sm:$0xf]
        %v734 = vld [vmem:[%s4] sm:$0x7]
        %v736 = vperm.slane %v734, 0
        %v737 = vperm.slane %v734, 1
        %v738 = vperm.slane %v734, 2
        %v774 = vunpack.c.l.b16 %v702
        %v775 = vunpack.c.h.b16 %v702
        %v776 = vunpack.c.l.b16 %v703
        %v777 = vunpack.c.l.b16 %v704
        %v778 = vunpack.c.h.b16 %v704
        %v779 = vunpack.c.l.b16 %v705
        %v780 = vunpack.c.l.b16 %v706
        %v781 = vunpack.c.h.b16 %v706
        %v782 = vunpack.c.l.b16 %v707
        %v783 = vunpack.c.l.b16 %v708
        %v784 = vunpack.c.h.b16 %v708
        %v785 = vunpack.c.l.b16 %v709
        %v786 = vunpack.c.l.b16 %v710
        %v787 = vunpack.c.h.b16 %v710
        %v788 = vunpack.c.l.b16 %v711
        %v789 = vunpack.c.l.b16 %v712
        %v790 = vunpack.c.h.b16 %v712
        %v791 = vunpack.c.l.b16 %v713
        %v792 = vunpack.c.l.b16 %v714
        %v793 = vunpack.c.h.b16 %v714
        %v794 = vunpack.c.l.b16 %v715
        %v795 = vunpack.c.l.b16 %v716
        %v796 = vunpack.c.h.b16 %v716
        %v797 = vunpack.c.l.b16 %v717
        %v798 = vunpack.c.l.b16 %v718
        %v799 = vunpack.c.h.b16 %v718
        %v800 = vunpack.c.l.b16 %v719
        %v801 = vunpack.c.l.b16 %v720
        %v802 = vunpack.c.h.b16 %v720
        %v803 = vunpack.c.l.b16 %v721
        %v804 = vunpack.c.l.b16 %v722
        %v805 = vunpack.c.h.b16 %v722
        %v806 = vunpack.c.l.b16 %v723
        %v807 = vunpack.c.l.b16 %v724
        %v808 = vunpack.c.h.b16 %v724
        %v809 = vunpack.c.l.b16 %v725
        %v810 = vunpack.c.l.b16 %v726
        %v811 = vunpack.c.h.b16 %v726
        %v812 = vunpack.c.l.b16 %v727
        %v813 = vunpack.c.l.b16 %v728
        %v814 = vunpack.c.h.b16 %v728
        %v815 = vunpack.c.l.b16 %v729
        %v816 = vunpack.c.l.b16 %v730
        %v817 = vunpack.c.h.b16 %v730
        %v818 = vunpack.c.l.b16 %v731
        %v819 = vunpack.c.l.b16 %v732
        %v820 = vunpack.c.h.b16 %v732
        %v821 = vunpack.c.l.b16 %v733
        %v822 = vpack.c.b16 %v777, %v774
        %v823 = vpack.c.b16 %v778, %v775
        %v824 = vpack.c.b16 %v779, %v776
        %v825 = vpack.c.b16 %v783, %v780
        %v826 = vpack.c.b16 %v784, %v781
        %v827 = vpack.c.b16 %v785, %v782
        %v828 = vpack.c.b16 %v789, %v786
        %v829 = vpack.c.b16 %v790, %v787
        %v830 = vpack.c.b16 %v791, %v788
        %v831 = vpack.c.b16 %v795, %v792
        %v832 = vpack.c.b16 %v796, %v793
        %v833 = vpack.c.b16 %v797, %v794
        %v834 = vpack.c.b16 %v801, %v798
        %v835 = vpack.c.b16 %v802, %v799
        %v836 = vpack.c.b16 %v803, %v800
        %v837 = vpack.c.b16 %v807, %v804
        %v838 = vpack.c.b16 %v808, %v805
        %v839 = vpack.c.b16 %v809, %v806
        %v840 = vpack.c.b16 %v813, %v810
        %v841 = vpack.c.b16 %v814, %v811
        %v842 = vpack.c.b16 %v815, %v812
        %v843 = vpack.c.b16 %v819, %v816
        %v844 = vpack.c.b16 %v820, %v817
        %v845 = vpack.c.b16 %v821, %v818
        %870 = vmatpush.bf16.msra.mxu0 %v843
        %871 = vmatpush.bf16.msra.mxu0 %v840
        %872 = vmatpush.bf16.msra.mxu0 %v837
        %873 = vmatpush.bf16.msra.mxu0 %v834
        %874 = vmatpush.bf16.msra.mxu0 %v831
        %875 = vmatpush.bf16.msra.mxu0 %v828
        %876 = vmatpush.bf16.msra.mxu0 %v825
        %877 = vmatpush.bf16.msra.mxu0 %v822
        %878 = vmatmul.bf16.gmra.mxu0 %v694
        %v879 = vpop.f32.mrf.mxu0
        %v880 = vadd.f32 %v736, %v879
        %v881 = vpop.f32.mrf.mxu0
        %v882 = vadd.f32 %v736, %v881
        %883 = vmatmul.bf16.gmra.mxu0 %v695
        %v884 = vpop.f32.mrf.mxu0
        %v885 = vadd.f32 %v736, %v884
        %v886 = vpop.f32.mrf.mxu0
        %v887 = vadd.f32 %v736, %v886
        %888 = vmatmul.bf16.gmra.mxu0 %v696
        %v889 = vpop.f32.mrf.mxu0
        %v890 = vadd.f32 %v736, %v889
        %v891 = vpop.f32.mrf.mxu0
        %v892 = vadd.f32 %v736, %v891
        %893 = vmatmul.bf16.gmra.mxu0 %v697
        %v894 = vpop.f32.mrf.mxu0
        %v895 = vadd.f32 %v736, %v894
        %v896 = vpop.f32.mrf.mxu0
        %v897 = vadd.f32 %v736, %v896
        %898 = vmatmul.bf16.gmra.mxu0 %v698
        %v899 = vpop.f32.mrf.mxu0
        %v900 = vadd.f32 %v736, %v899
        %v901 = vpop.f32.mrf.mxu0
        %v902 = vadd.f32 %v736, %v901
        %903 = vmatmul.bf16.gmra.mxu0 %v699
        %v904 = vpop.f32.mrf.mxu0
        %v905 = vadd.f32 %v736, %v904
        %v906 = vpop.f32.mrf.mxu0
        %v907 = vadd.f32 %v736, %v906
        %908 = vmatmul.bf16.gmra.mxu0 %v700
        %v909 = vpop.f32.mrf.mxu0
        %v910 = vadd.f32 %v736, %v909
        %v911 = vpop.f32.mrf.mxu0
        %v912 = vadd.f32 %v736, %v911
        %913 = vmatmul.bf16.gmra.mxu0 %v701
        %v914 = vpop.f32.mrf.mxu0
        %v915 = vadd.f32 %v736, %v914
        %v916 = vpop.f32.mrf.mxu0
        %v917 = vadd.f32 %v736, %v916
        %918 = vdwg.mxu0
        %919 = vmatpush.bf16.msra.mxu0 %v844
        %920 = vmatpush.bf16.msra.mxu0 %v841
        %921 = vmatpush.bf16.msra.mxu0 %v838
        %922 = vmatpush.bf16.msra.mxu0 %v835
        %923 = vmatpush.bf16.msra.mxu0 %v832
        %924 = vmatpush.bf16.msra.mxu0 %v829
        %925 = vmatpush.bf16.msra.mxu0 %v826
        %926 = vmatpush.bf16.msra.mxu0 %v823
        %927 = vmatmul.bf16.gmra.mxu0 %v694
        %v928 = vpop.f32.mrf.mxu0
        %v929 = vadd.f32 %v737, %v928
        %v930 = vpop.f32.mrf.mxu0
        %v931 = vadd.f32 %v737, %v930
        %932 = vmatmul.bf16.gmra.mxu0 %v695
        %v933 = vpop.f32.mrf.mxu0
        %v934 = vadd.f32 %v737, %v933
        %v935 = vpop.f32.mrf.mxu0
        %v936 = vadd.f32 %v737, %v935
        %937 = vmatmul.bf16.gmra.mxu0 %v696
        %v938 = vpop.f32.mrf.mxu0
        %v939 = vadd.f32 %v737, %v938
        %v940 = vpop.f32.mrf.mxu0
        %v941 = vadd.f32 %v737, %v940
        %942 = vmatmul.bf16.gmra.mxu0 %v697
        %v943 = vpop.f32.mrf.mxu0
        %v944 = vadd.f32 %v737, %v943
        %v945 = vpop.f32.mrf.mxu0
        %v946 = vadd.f32 %v737, %v945
        %947 = vmatmul.bf16.gmra.mxu0 %v698
        %v948 = vpop.f32.mrf.mxu0
        %v949 = vadd.f32 %v737, %v948
        %v950 = vpop.f32.mrf.mxu0
        %v951 = vadd.f32 %v737, %v950
        %952 = vmatmul.bf16.gmra.mxu0 %v699
        %v953 = vpop.f32.mrf.mxu0
        %v954 = vadd.f32 %v737, %v953
        %v955 = vpop.f32.mrf.mxu0
        %v956 = vadd.f32 %v737, %v955
        %957 = vmatmul.bf16.gmra.mxu0 %v700
        %v958 = vpop.f32.mrf.mxu0
        %v959 = vadd.f32 %v737, %v958
        %v960 = vpop.f32.mrf.mxu0
        %v961 = vadd.f32 %v737, %v960
        %962 = vmatmul.bf16.gmra.mxu0 %v701
        %v963 = vpop.f32.mrf.mxu0
        %v964 = vadd.f32 %v737, %v963
        %v965 = vpop.f32.mrf.mxu0
        %v966 = vadd.f32 %v737, %v965
        %967 = vdwg.mxu0
        %968 = vmatpush.bf16.msra.mxu0 %v845
        %969 = vmatpush.bf16.msra.mxu0 %v842
        %970 = vmatpush.bf16.msra.mxu0 %v839
        %971 = vmatpush.bf16.msra.mxu0 %v836
        %972 = vmatpush.bf16.msra.mxu0 %v833
        %973 = vmatpush.bf16.msra.mxu0 %v830
        %974 = vmatpush.bf16.msra.mxu0 %v827
        %975 = vmatpush.bf16.msra.mxu0 %v824
        %976 = vmatmul.bf16.gmra.mxu0 %v694
        %v977 = vpop.f32.mrf.mxu0
        %v978 = vadd.f32 %v738, %v977
        %v979 = vpop.f32.mrf.mxu0
        %v980 = vadd.f32 %v738, %v979
        %981 = vmatmul.bf16.gmra.mxu0 %v695
        %v982 = vpop.f32.mrf.mxu0
        %v983 = vadd.f32 %v738, %v982
        %v984 = vpop.f32.mrf.mxu0
        %v985 = vadd.f32 %v738, %v984
        %986 = vmatmul.bf16.gmra.mxu0 %v696
        %v987 = vpop.f32.mrf.mxu0
        %v988 = vadd.f32 %v738, %v987
        %v989 = vpop.f32.mrf.mxu0
        %v990 = vadd.f32 %v738, %v989
        %991 = vmatmul.bf16.gmra.mxu0 %v697
        %v992 = vpop.f32.mrf.mxu0
        %v993 = vadd.f32 %v738, %v992
        %v994 = vpop.f32.mrf.mxu0
        %v995 = vadd.f32 %v738, %v994
        %996 = vmatmul.bf16.gmra.mxu0 %v698
        %v997 = vpop.f32.mrf.mxu0
        %v998 = vadd.f32 %v738, %v997
        %v999 = vpop.f32.mrf.mxu0
        %v1000 = vadd.f32 %v738, %v999
        %1001 = vmatmul.bf16.gmra.mxu0 %v699
        %v1002 = vpop.f32.mrf.mxu0
        %v1003 = vadd.f32 %v738, %v1002
        %v1004 = vpop.f32.mrf.mxu0
        %v1005 = vadd.f32 %v738, %v1004
        %1006 = vmatmul.bf16.gmra.mxu0 %v700
        %v1007 = vpop.f32.mrf.mxu0
        %v1008 = vadd.f32 %v738, %v1007
        %v1009 = vpop.f32.mrf.mxu0
        %v1010 = vadd.f32 %v738, %v1009
        %1011 = vmatmul.bf16.gmra.mxu0 %v701
        %v1012 = vpop.f32.mrf.mxu0
        %v1013 = vadd.f32 %v738, %v1012
        %v1014 = vpop.f32.mrf.mxu0
        %v1015 = vadd.f32 %v738, %v1014
        %1016 = vdwg.mxu0
        %v1017 = vpack.c.bf16 %v929, %v880
        %v1018 = vpack.c.bf16 %v978, %v978
        %v1019 = vpack.c.bf16 %v931, %v882
        %v1020 = vpack.c.bf16 %v980, %v980
        %v1021 = vpack.c.bf16 %v934, %v885
        %v1022 = vpack.c.bf16 %v983, %v983
        %v1023 = vpack.c.bf16 %v936, %v887
        %v1024 = vpack.c.bf16 %v985, %v985
        %v1025 = vpack.c.bf16 %v939, %v890
        %v1026 = vpack.c.bf16 %v988, %v988
        %v1027 = vpack.c.bf16 %v941, %v892
        %v1028 = vpack.c.bf16 %v990, %v990
        %v1029 = vpack.c.bf16 %v944, %v895
        %v1030 = vpack.c.bf16 %v993, %v993
        %v1031 = vpack.c.bf16 %v946, %v897
        %v1032 = vpack.c.bf16 %v995, %v995
        %v1033 = vpack.c.bf16 %v949, %v900
        %v1034 = vpack.c.bf16 %v998, %v998
        %v1035 = vpack.c.bf16 %v951, %v902
        %v1036 = vpack.c.bf16 %v1000, %v1000
        %v1037 = vpack.c.bf16 %v954, %v905
        %v1038 = vpack.c.bf16 %v1003, %v1003
        %v1039 = vpack.c.bf16 %v956, %v907
        %v1040 = vpack.c.bf16 %v1005, %v1005
        %v1041 = vpack.c.bf16 %v959, %v910
        %v1042 = vpack.c.bf16 %v1008, %v1008
        %v1043 = vpack.c.bf16 %v961, %v912
        %v1044 = vpack.c.bf16 %v1010, %v1010
        %v1045 = vpack.c.bf16 %v964, %v915
        %v1046 = vpack.c.bf16 %v1013, %v1013
        %v1047 = vpack.c.bf16 %v966, %v917
        %v1048 = vpack.c.bf16 %v1015, %v1015
        %1049 = vst [vmem:[%s308] sm:$0xff] %v1017
        %1050 = vst [vmem:[%s308 + $0x8] sm:$0xf] %v1018
        %1051 = vst [vmem:[%s308 + $0xc] sm:$0xff] %v1019
        %1052 = vst [vmem:[%s308 + $0x14] sm:$0xf] %v1020
        %1053 = vst [vmem:[%s308 + $0x18] sm:$0xff] %v1021
        %1054 = vst [vmem:[%s308 + $0x20] sm:$0xf] %v1022
        %1055 = vst [vmem:[%s308 + $0x24] sm:$0xff] %v1023
        %1056 = vst [vmem:[%s308 + $0x2c] sm:$0xf] %v1024
        %1057 = vst [vmem:[%s308 + $0x30] sm:$0xff] %v1025
        %1058 = vst [vmem:[%s308 + $0x38] sm:$0xf] %v1026
        %1059 = vst [vmem:[%s308 + $0x3c] sm:$0xff] %v1027
        %1060 = vst [vmem:[%s308 + $0x44] sm:$0xf] %v1028
        %1061 = vst [vmem:[%s308 + $0x48] sm:$0xff] %v1029
        %1062 = vst [vmem:[%s308 + $0x50] sm:$0xf] %v1030
        %1063 = vst [vmem:[%s308 + $0x54] sm:$0xff] %v1031
        %1064 = vst [vmem:[%s308 + $0x5c] sm:$0xf] %v1032
        %1065 = vst [vmem:[%s308 + $0x60] sm:$0xff] %v1033
        %1066 = vst [vmem:[%s308 + $0x68] sm:$0xf] %v1034
        %1067 = vst [vmem:[%s308 + $0x6c] sm:$0xff] %v1035
        %1068 = vst [vmem:[%s308 + $0x74] sm:$0xf] %v1036
        %1069 = vst [vmem:[%s308 + $0x78] sm:$0xff] %v1037
        %1070 = vst [vmem:[%s308 + $0x80] sm:$0xf] %v1038
        %1071 = vst [vmem:[%s308 + $0x84] sm:$0xff] %v1039
        %1072 = vst [vmem:[%s308 + $0x8c] sm:$0xf] %v1040
        %1073 = vst [vmem:[%s308 + $0x90] sm:$0xff] %v1041
        %1074 = vst [vmem:[%s308 + $0x98] sm:$0xf] %v1042
        %1075 = vst [vmem:[%s308 + $0x9c] sm:$0xff] %v1043
        %1076 = vst [vmem:[%s308 + $0xa4] sm:$0xf] %v1044
        %1077 = vst [vmem:[%s308 + $0xa8] sm:$0xff] %v1045
        %1078 = vst [vmem:[%s308 + $0xb0] sm:$0xf] %v1046
        %1079 = vst [vmem:[%s308 + $0xb4] sm:$0xff] %v1047
        %1080 = vst [vmem:[%s308 + $0xbc] sm:$0xf] %v1048
        %s1081 = sand.u32 %s158, 1
        %s1082 = scalar_lea.sflag [#allocation4], %s1081
        %s1083 = sand.u32 %s158, 1
        %s1084 = smul.addr %s1083, 192
        %s1085 = scalar_lea.vmem [#allocation10], %s1084
        // Predicated region
        $region57: #{tpu_custom_call.1} parent=39 // pred_check
          %p1086 = pneg %p168
        $region58: #{tpu_custom_call.1} parent=39 // pred_check_branch
          %1088 = sbr.rel (%p1086) target = $region60
        $region59: #{tpu_custom_call.1} parent=39 // pred_region
          %s1089 = smul.u32 16, %s29
          %1091 = vsyncadd %s1082, 0
          %s1092 = smul.addr %s1089, 3
          %s1093 = smul.addr %s28, 96
          %s1094 = sadd.s32 %s1092, %s1093
          %s1095 = smul.addr %s1094, 4
          %s1096 = scalar_lea.hbm %s5, %s1095
          %s1097 = sshll.u32 %s1085, 4
          %s1098 = int_to_ptr.vmem [resolvable:$true] %s1097
          %s1099 = sshll.u32 %s1096, 4
          %s1100 = int_to_ptr.hbm [resolvable:$true] %s1099
          %1105 = dma.vmem_to_hbm [thread:$0]  %s1098, 3072, %s1100, %s1082, 192, 192, 12
        $region60: #{tpu_custom_call.1} parent=39 // pred_fallthru
          _
      $region40: #{tpu_custom_call.1} parent=5 // pred_fallthru
        _
      %p1106 = scmp.le.s32.totalorder 2, %s19
      // Predicated region
      $region61: #{tpu_custom_call.1} parent=5 // pred_check
        %p1107 = pneg %p1106
      $region62: #{tpu_custom_call.1} parent=5 // pred_check_branch
        %1109 = sbr.rel (%p1107) target = $region64
      $region63: #{tpu_custom_call.1} parent=5 // pred_region
        %s1110 = ssub.s32 %s19, 2
        // Predicated region
        $region65: #{tpu_custom_call.1} parent=63 // pred_check
          %p1111 = pneg %p174
        $region66: #{tpu_custom_call.1} parent=63 // pred_check_branch
          %1113 = sbr.rel (%p1111) target = $region68
        $region67: #{tpu_custom_call.1} parent=63 // pred_region
          %s1114 = sand.u32 %s159, 1
          %s1115 = scalar_lea.sflag [#allocation4], %s1114
          %s1116 = sand.u32 %s159, 1
          %s1117 = smul.addr %s1116, 192
          %s1118 = scalar_lea.vmem [#allocation10], %s1117
          %1120 = dma.done %s1115, 3072
        $region68: #{tpu_custom_call.1} parent=63 // pred_fallthru
          _
      $region64: #{tpu_custom_call.1} parent=5 // pred_fallthru
        _
    $region6: #{tpu_custom_call.1} parent=1 // loop_footer
      %s23 = sadd.s32 1, %s19
    $region7: #{tpu_custom_call.1} parent=1 // loop_footer_branch
      %18 = sbr.rel target = $region3
    $region8: #{tpu_custom_call.1} parent=1 // loop_exit
      _
    %1121 = vsyncpa [#allocation3], 1
    %s1122 = scalar_lea.sflag [#allocation3], 1
    %1123 = vsyncpa %s1122, 1
    %1124 = vsyncpa [#allocation6], 1
    %1125 = vsyncpa [#allocation9], 1
    %1126 = vsyncpa [#allocation4], 1
    %s1127 = scalar_lea.sflag [#allocation4], 1
    %1128 = vsyncpa %s1127, 1

</llo_original>
